<compile_context>
chip_gen: v7x
topology: tpu7x:2x2x1
jax: 0.10.0
libtpu: 0.0.40
codegen_flags: <defaults>
</compile_context>

<pallas_src>
import functools

import jax
import jax.numpy as jnp
from jax.experimental import pallas as pl
from jax.experimental.pallas import tpu as pltpu


def _round_up(v, m):
    return ((v + m - 1) // m) * m


@functools.lru_cache(maxsize=None)
def _vmem_budgets():
    """Return (tile_budget_bytes, vmem_limit_bytes, num_tensorcores)."""
    try:
        cap = int(pltpu.get_tpu_info().vmem_capacity_bytes)
    except Exception:
        cap = 64 * 1024 * 1024                      # conservative v7x-sized default
    tile_budget = min(cap // 4, 32 * 1024 * 1024)   # v7x: 16 MiB, v5e/v6e: 32 MiB
    vmem_limit = min(int(cap * 0.6), 96 * 1024 * 1024)  # v7x: ~38 MiB, v5e/v6e: ~77 MiB
    # Heuristic: 64 MiB per-TC VMEM => megacore generation (v7x, 2 TCs/chip).
    num_tc = 2 if cap <= 80 * 1024 * 1024 else 1
    return tile_budget, vmem_limit, num_tc


def _resident_spec(block_shape, index_map):
    """BlockSpec for a grid-constant block: single-buffer it so the resident
    copy is not pointlessly double-buffered.  Returns (spec, buffer_count)."""
    try:
        return pl.BlockSpec(block_shape, index_map,
                            pipeline_mode=pl.Buffered(1)), 1
    except TypeError:                               # older jax: no pipeline_mode
        return pl.BlockSpec(block_shape, index_map), 2


def _choose_group_fusion(groups, gd, gf, itemsize, budget_bytes):
    """Smallest divisor k of `groups` whose fused block (k*gd, k*gf) roughly
    fills the MXU, as long as the k-times-larger block-diagonal weight still
    fits a fraction of the VMEM budget."""
    target = 256                                    # v6e/v7x MXU dim (>=128 on v5e)
    weight_budget = budget_bytes // 3
    best = 1
    for k in range(1, groups + 1):
        if groups % k:
            continue
        fused_bytes = k * groups * gd * gf * itemsize
        if k > 1 and fused_bytes > weight_budget:
            break
        best = k
        if k * gd >= target and k * gf >= target:
            break
    return best


def _choose_tm(M, d, out_dim, itemsize, resident_bytes, num_tc, budget_bytes):
    """Largest legal row tile fitting the VMEM budget.  Counts the f32
    accumulator; balances grid steps across TensorCores on megacore chips."""
    sub = {4: 8, 2: 16, 1: 32}.get(itemsize, 8)     # sublane packing per dtype
    m_pad = _round_up(max(M, 1), sub)
    # double-buffered x/out row tiles + single-buffered f32 accumulator row
    per_row = 2 * (d + out_dim) * itemsize + 4 * out_dim
    avail = int(0.85 * (budget_bytes - resident_bytes))   # headroom for Mosaic scratch
    if avail < per_row * sub:
        # TODO(synk): resident weight overflows the budget -- stream (fused)
        # groups via a second grid axis instead of degrading to tiny row tiles.
        return sub
    fit = max(sub, (min(avail // per_row, 4096) // sub) * sub)

    if num_tc <= 1:
        # v5e/v6e: grid is a serial loop -- biggest tile, fewest steps.
        return int(min(m_pad, fit))

    # v7x megacore: even number of near-equal steps so both TCs stay balanced.
    steps = max(num_tc, -(-m_pad // fit))
    steps = _round_up(steps, num_tc)
    if m_pad // steps >= 1024:                      # plenty of work -> >= 4 steps
        steps = max(steps, 2 * num_tc)
    tm = _round_up(-(-m_pad // steps), sub)
    return int(min(tm, fit, m_pad))


def _group_linear_kernel(x_ref, w_ref, b_ref, o_ref, acc_ref, *, n_blocks, bd, bf):
    # x_ref:   (tm, d)            activation row tile (streams through the grid)
    # w_ref:   (n_blocks, bd, bf) fused block-diagonal weight, resident in VMEM
    # b_ref:   (1, out_dim)       bias (f32), resident in VMEM
    # o_ref:   (tm, out_dim)      lane-dense output slab
    # acc_ref: (tm, out_dim) f32  VMEM scratch accumulator
    #
    # Per-block slice-writes into the scratch bound live ranges to a single
    # block's (tm, bf) result -- no in-register concatenate of all groups.
    for gi in range(n_blocks):                      # static unroll, static slices
        acc_ref[:, gi * bf:(gi + 1) * bf] = jnp.dot(
            x_ref[:, gi * bd:(gi + 1) * bd], w_ref[gi],
            preferred_element_type=jnp.float32)     # MXU, f32 accumulation
    # TODO(synk): for very large n_blocks (>16) switch this static unroll to a
    # lax.fori_loop (or a second grid axis over blocks) to bound bundle size.
    o_ref[...] = (acc_ref[...] + b_ref[...]).astype(o_ref.dtype)


@functools.partial(jax.jit, static_argnames=("tm", "compute_dtype"))
def group_linear(x, group_weight, group_bias, *, tm=None, compute_dtype=None):
    """Pallas implementation of GroupLinear.forward.

    x:             (t, b, in_dim)
    group_weight:  (groups, in_dim // groups, out_dim // groups)
    group_bias:    (out_dim,)
    compute_dtype: optional MXU dtype (e.g. jnp.bfloat16).  Default keeps
                   x.dtype (matches the PyTorch f32 semantics); bf16 is the
                   recommended lever on v5e where the MXU has no f32 path.
    returns:       (t, b, out_dim)
    """
    t, b, d = x.shape
    groups, gd, gf = group_weight.shape
    assert groups * gd == d, "in_planes must equal groups * group_in_dim"
    out_dim = groups * gf
    out_dtype = x.dtype

    if compute_dtype is None:
        compute_dtype = x.dtype
    compute_dtype = jnp.dtype(compute_dtype)
    itemsize = compute_dtype.itemsize

    M = t * b
    x2 = x.reshape(M, d).astype(compute_dtype)          # free row-major view
    bias2 = group_bias.reshape(1, out_dim).astype(jnp.float32)

    tile_budget, vmem_limit, num_tc = _vmem_budgets()

    # --- Group fusion so each matmul fills the MXU -------------------------
    k = _choose_group_fusion(groups, gd, gf, itemsize, tile_budget)
    n_blocks = groups // k
    bd, bf = k * gd, k * gf
    w = group_weight.astype(compute_dtype)
    if k > 1:
        # Block-diagonal fusion of k adjacent groups (built once, outside kernel).
        eye = jnp.eye(k, dtype=compute_dtype)
        w = jnp.einsum("nkdf,kj->nkdjf",
                       w.reshape(n_blocks, k, gd, gf), eye).reshape(n_blocks, bd, bf)

    # --- Resident (constant-index) weight & bias, single-buffered ----------
    w_spec, w_bufs = _resident_spec((n_blocks, bd, bf), lambda mi: (0, 0, 0))
    b_spec, b_bufs = _resident_spec((1, out_dim), lambda mi: (0, 0))
    resident_bytes = (n_blocks * bd * bf * itemsize * w_bufs
                      + out_dim * 4 * b_bufs)

    if tm is None:
        tm = _choose_tm(M, d, out_dim, itemsize, resident_bytes, num_tc, tile_budget)
    grid = (pl.cdiv(M, tm),)

    kernel = functools.partial(_group_linear_kernel,
                               n_blocks=n_blocks, bd=bd, bf=bf)

    out2 = pl.pallas_call(
        kernel,
        out_shape=jax.ShapeDtypeStruct((M, out_dim), out_dtype),
        grid_spec=pltpu.PrefetchScalarGridSpec(
            num_scalar_prefetch=0,
            grid=grid,
            in_specs=[
                pl.BlockSpec((tm, d), lambda mi: (mi, 0)),   # streaming rows
                w_spec,                                       # resident weight
                b_spec,                                       # resident f32 bias
            ],
            out_specs=pl.BlockSpec((tm, out_dim), lambda mi: (mi, 0)),
            scratch_shapes=[pltpu.VMEM((tm, out_dim), jnp.float32)],
        ),
        compiler_params=pltpu.CompilerParams(
            dimension_semantics=("parallel",),
            vmem_limit_bytes=vmem_limit,
        ),
        cost_estimate=pl.CostEstimate(
            flops=2 * M * out_dim * bd,
            transcendentals=0,
            bytes_accessed=((M * d + M * out_dim) * itemsize
                            + n_blocks * bd * bf * itemsize + out_dim * 4),
        ),
    )(x2, w, bias2)

    return out2.reshape(t, b, out_dim)                  # free view


if __name__ == "__main__":
    # Small shapes consistent with the module's forward: x is (t, b, d).
    t, b = 8, 2
    in_planes, out_channels, groups = 32, 64, 4
    gd, gf = in_planes // groups, out_channels // groups

    key = jax.random.PRNGKey(0)
    kx, kw, kb = jax.random.split(key, 3)
    x = jax.random.normal(kx, (t, b, in_planes), dtype=jnp.float32)
    # NOTE: the PyTorch module inits these to zeros; deterministic random
    # values keep the correctness check non-trivial.
    group_weight = jax.random.normal(kw, (groups, gd, gf), dtype=jnp.float32) * 0.02
    group_bias = jax.random.normal(kb, (out_channels,), dtype=jnp.float32) * 0.02

    out = group_linear(x, group_weight, group_bias)
    out = jax.block_until_ready(out)

    # Reference (mirrors torch.einsum('tbgd,gdf->tbgf') + bias).
    ref = jnp.einsum("tbgd,gdf->tbgf",
                     x.reshape(t, b, groups, gd), group_weight)
    ref = ref.reshape(t, b, out_channels) + group_bias

    assert out.shape == (t, b, out_channels)
    assert jnp.allclose(out, ref, atol=1e-5, rtol=1e-5), "mismatch vs reference"
    print("KERNEL_OK")
</pallas_src>

<mosaic_0001>
module attributes {stable_mosaic.version = 11 : i64} {
  func.func @_group_linear_kernel(%arg0: i32, %arg1: memref<8x32xf32, #tpu.memory_space<vmem>>, %arg2: memref<1x32x64xf32, #tpu.memory_space<vmem>>, %arg3: memref<1x64xf32, #tpu.memory_space<vmem>>, %arg4: memref<8x64xf32, #tpu.memory_space<vmem>>, %arg5: memref<8x64xf32, #tpu.memory_space<vmem>>) attributes {dimension_semantics = [#tpu.dimension_semantics<parallel>], iteration_bounds = array<i64: 2>, scalar_prefetch = 0 : i64, scratch_operands = 1 : i64, tpu.core_type = #tpu.core_type<tc>, window_params = [{transform_indices = @transform_0, window_bounds = array<i64: 8, 32>}, {pipeline_mode = #tpu.pipeline_mode<synchronous>, transform_indices = @transform_1, window_bounds = array<i64: 1, 32, 64>}, {pipeline_mode = #tpu.pipeline_mode<synchronous>, transform_indices = @transform_2, window_bounds = array<i64: 1, 64>}, {transform_indices = @transform_3, window_bounds = array<i64: 8, 64>}]} {
    %c0 = arith.constant 0 : index
    %c0_0 = arith.constant 0 : index
    %0 = vector.load %arg1[%c0, %c0_0] : memref<8x32xf32, #tpu.memory_space<vmem>>, vector<8x32xf32>
    %c0_1 = arith.constant 0 : index
    %c0_2 = arith.constant 0 : index
    %c0_3 = arith.constant 0 : index
    %1 = vector.load %arg2[%c0_1, %c0_2, %c0_3] : memref<1x32x64xf32, #tpu.memory_space<vmem>>, vector<1x32x64xf32>
    %2 = vector.shape_cast %1 : vector<1x32x64xf32> to vector<32x64xf32>
    %cst = arith.constant dense<0.000000e+00> : vector<8x64xf32>
    %3 = tpu.matmul %0, %2, %cst {dimension_numbers = #tpu.dot_dimension_numbers<[1], [0], [0], [1], [0, 0, 1, 1], [], []>} : vector<8x32xf32>, vector<32x64xf32>, vector<8x64xf32> -> vector<8x64xf32>
    %c0_4 = arith.constant 0 : index
    %c0_5 = arith.constant 0 : index
    %4 = vector.load %arg5[%c0_4, %c0_5] : memref<8x64xf32, #tpu.memory_space<vmem>>, vector<8x64xf32>
    tpu.vector_store %arg5[%c0_4, %c0_5], %3 {strides = array<i32>} : memref<8x64xf32, #tpu.memory_space<vmem>>, vector<8x64xf32>,
    %c0_6 = arith.constant 0 : index
    %c0_7 = arith.constant 0 : index
    %5 = vector.load %arg5[%c0_6, %c0_7] : memref<8x64xf32, #tpu.memory_space<vmem>>, vector<8x64xf32>
    %c0_8 = arith.constant 0 : index
    %c0_9 = arith.constant 0 : index
    %6 = vector.load %arg3[%c0_8, %c0_9] : memref<1x64xf32, #tpu.memory_space<vmem>>, vector<1x64xf32>
    %7 = vector.broadcast %6 : vector<1x64xf32> to vector<8x64xf32>
    %8 = arith.addf %5, %7 : vector<8x64xf32>
    %c0_10 = arith.constant 0 : index
    %c0_11 = arith.constant 0 : index
    %9 = vector.load %arg4[%c0_10, %c0_11] : memref<8x64xf32, #tpu.memory_space<vmem>>, vector<8x64xf32>
    tpu.vector_store %arg4[%c0_10, %c0_11], %8 {strides = array<i32>} : memref<8x64xf32, #tpu.memory_space<vmem>>, vector<8x64xf32>,
    return
  }
  func.func @transform_0(%arg0: i32) -> (i32, i32) {
    %c0_i32 = arith.constant 0 : i32
    %c0_i32_0 = arith.constant 0 : i32
    return %arg0, %c0_i32 : i32, i32
  }
  func.func @transform_1(%arg0: i32) -> (i32, i32, i32) {
    %c0_i32 = arith.constant 0 : i32
    %c0_i32_0 = arith.constant 0 : i32
    %c0_i32_1 = arith.constant 0 : i32
    %c0_i32_2 = arith.constant 0 : i32
    return %c0_i32, %c0_i32_0, %c0_i32_1 : i32, i32, i32
  }
  func.func @transform_2(%arg0: i32) -> (i32, i32) {
    %c0_i32 = arith.constant 0 : i32
    %c0_i32_0 = arith.constant 0 : i32
    %c0_i32_1 = arith.constant 0 : i32
    return %c0_i32, %c0_i32_0 : i32, i32
  }
  func.func @transform_3(%arg0: i32) -> (i32, i32) {
    %c0_i32 = arith.constant 0 : i32
    %c0_i32_0 = arith.constant 0 : i32
    return %arg0, %c0_i32 : i32, i32
  }
}

</mosaic_0001>

<llo_original>
// kernel: group_linear.1
$region0: #{group_linear.1}
  #allocation0 [shape = 'u32[]', space=smem, size = 0x4, offset = 0x4, fixed_abs, tag = 'smem constant byte address 0x4 - core index']
  #allocation1 [shape = 'u32[144,128]{1,0:T(1,128)}', space=vmem, size = 0x12000, scoped, tag = 'internal scratch']
  #allocation2 [shape = 'f32[8,64]{1,0:T(8,128)}', space=vmem, size = 0x1000, scoped, tag = 'scratch operand']
  %s0 = inlined_call_operand.vmem [shape: f32[16,32], index: 0, kind: input, shape index: {}]
  %s1 = inlined_call_operand.vmem [shape: f32[1,32,64], index: 1, kind: input, shape index: {}]
  %s2 = inlined_call_operand.vmem [shape: f32[1,64], index: 2, kind: input, shape index: {}]
  %s3 = inlined_call_operand.hbm [shape: f32[16,64], index: 3, kind: output, shape index: {}]
  %s4 = sld [smem:[#allocation0]]
  $region45: #{group_linear.1} parent=0
    _
  %s6 = ssub.s32 1, %s4
  %s7 = scalar_select 0, %s6, %s4
  $region1: #{group_linear.1} parent=0
    #allocation3 [shape = 'u8[8192]{0}', space=vmem, size = 0x2000, scoped, tag = 'output window, operand 0']
    #allocation4 [shape = 's32[2]{0}', space=sflag, size = 0x8, scoped, tag = 'scoped memory for group_linear.1']
    %8 = vsyncpa [#allocation4], 0
    %s9 = scalar_lea.sflag [#allocation4], 1
    %10 = vsyncpa %s9, 0
    loop: start=0, step=1, limit=4
    $region2: #{group_linear.1} parent=1 // loop_pre_header
      _
    $region3: #{group_linear.1} parent=1 // loop_header
      %s12 = sphi 0, %s16
      %p13 = scmp.ge.s32.totalorder %s12, 4
      %s22 = sphi 0, %s24
      %s25 = sphi 0, %s22
      %s26 = sphi 0, %s25
      %s42 = sphi 0, %s26
      %s46 = sphi 0, %s46
      %s48 = sphi 0, %s46
      %s49 = sphi 0, %s48
      %s63 = sphi 0, %s49
      %s67 = sphi 0, %s67
      %s69 = sphi 0, %s67
      %s70 = sphi 0, %s69
      %s84 = sphi 0, %s70
      %s90 = sphi 0, %s92
      %s93 = sphi 0, %s90
      %s94 = sphi 0, %s93
      %s110 = sphi 0, %s94
    $region4: #{group_linear.1} parent=1 // loop_header_branch
      %15 = sbr.rel (%p13) target = $region8
    $region5: #{group_linear.1} parent=1 // loop_body
      %s17 = ssub.s32 %s12, 1
      %s18 = ssub.s32 %s12, 2
      %s19 = sadd.s32 %s12, 1
      %s20 = ssub.s32 %s12, %s19
      %p21 = scmp.eq.s32.totalorder %s20, 0
      %s23 = sadd.s32 %s22, 1
      %s24 = scalar_select %p21, %s22, %s23
      %p27 = pneg %p21
      %p28 = scmp.eq.s32.totalorder %s12, 1
      %p29 = por %p27, %p28
      %p30 = scmp.ne.s32.totalorder %s22, %s25
      %p31 = scmp.eq.s32.totalorder %s12, 0
      %p32 = por %p30, %p31
      %p33 = scmp.ne.s32.totalorder %s22, %s25
      %p34 = scmp.eq.s32.totalorder %s17, 1
      %p35 = por %p33, %p34
      %p36 = scmp.ne.s32.totalorder %s25, %s26
      %p37 = scmp.eq.s32.totalorder %s17, 0
      %p38 = por %p36, %p37
      %p39 = scmp.ne.s32.totalorder %s25, %s26
      %p40 = scmp.eq.s32.totalorder %s18, 1
      %p41 = por %p39, %p40
      %p43 = scmp.ne.s32.totalorder %s26, %s42
      %p44 = scmp.eq.s32.totalorder %s18, 0
      %p45 = por %p43, %p44
      %s47 = sadd.s32 %s46, 1
      %p50 = scmp.eq.s32.totalorder %s12, 1
      %p51 = scmp.ne.s32.totalorder %s46, %s48
      %p52 = scmp.eq.s32.totalorder %s12, 0
      %p53 = por %p51, %p52
      %p54 = scmp.ne.s32.totalorder %s46, %s48
      %p55 = scmp.eq.s32.totalorder %s17, 1
      %p56 = por %p54, %p55
      %p57 = scmp.ne.s32.totalorder %s48, %s49
      %p58 = scmp.eq.s32.totalorder %s17, 0
      %p59 = por %p57, %p58
      %p60 = scmp.ne.s32.totalorder %s48, %s49
      %p61 = scmp.eq.s32.totalorder %s18, 1
      %p62 = por %p60, %p61
      %p64 = scmp.ne.s32.totalorder %s49, %s63
      %p65 = scmp.eq.s32.totalorder %s18, 0
      %p66 = por %p64, %p65
      %s68 = sadd.s32 %s67, 1
      %p71 = scmp.eq.s32.totalorder %s12, 1
      %p72 = scmp.ne.s32.totalorder %s67, %s69
      %p73 = scmp.eq.s32.totalorder %s12, 0
      %p74 = por %p72, %p73
      %p75 = scmp.ne.s32.totalorder %s67, %s69
      %p76 = scmp.eq.s32.totalorder %s17, 1
      %p77 = por %p75, %p76
      %p78 = scmp.ne.s32.totalorder %s69, %s70
      %p79 = scmp.eq.s32.totalorder %s17, 0
      %p80 = por %p78, %p79
      %p81 = scmp.ne.s32.totalorder %s69, %s70
      %p82 = scmp.eq.s32.totalorder %s18, 1
      %p83 = por %p81, %p82
      %p85 = scmp.ne.s32.totalorder %s70, %s84
      %p86 = scmp.eq.s32.totalorder %s18, 0
      %p87 = por %p85, %p86
      %s88 = ssub.s32 %s12, %s19
      %p89 = scmp.eq.s32.totalorder %s88, 0
      %s91 = sadd.s32 %s90, 1
      %s92 = scalar_select %p89, %s90, %s91
      %p95 = pneg %p89
      %p96 = scmp.eq.s32.totalorder %s12, 1
      %p97 = por %p95, %p96
      %p98 = scmp.ne.s32.totalorder %s90, %s93
      %p99 = scmp.eq.s32.totalorder %s12, 0
      %p100 = por %p98, %p99
      %p101 = scmp.ne.s32.totalorder %s90, %s93
      %p102 = scmp.eq.s32.totalorder %s17, 1
      %p103 = por %p101, %p102
      %p104 = scmp.ne.s32.totalorder %s93, %s94
      %p105 = scmp.eq.s32.totalorder %s17, 0
      %p106 = por %p104, %p105
      %p107 = scmp.ne.s32.totalorder %s93, %s94
      %p108 = scmp.eq.s32.totalorder %s18, 1
      %p109 = por %p107, %p108
      %p111 = scmp.ne.s32.totalorder %s94, %s110
      %p112 = scmp.eq.s32.totalorder %s18, 0
      %p113 = por %p111, %p112
      %p114 = scmp.le.s32.totalorder 1, %s12
      %p115 = scmp.lt.s32.totalorder %s12, 3
      %p116 = pnand %p114, %p115
      %p117 = pneg %p116
      // Predicated region
      $region9: #{group_linear.1} parent=5 // pred_check
        _
      $region10: #{group_linear.1} parent=5 // pred_check_branch
        %119 = sbr.rel (%p116) target = $region12
      $region11: #{group_linear.1} parent=5 // pred_region
        %s120 = ssub.s32 %s12, 1
        // Predicated region
        $region13: #{group_linear.1} parent=11 // pred_check
          %p121 = pneg %p59
        $region14: #{group_linear.1} parent=11 // pred_check_branch
          %123 = sbr.rel (%p121) target = $region16
        $region15: #{group_linear.1} parent=11 // pred_region
          _
        $region16: #{group_linear.1} parent=11 // pred_fallthru
          _
        // Predicated region
        $region17: #{group_linear.1} parent=11 // pred_check
          %p124 = pneg %p80
        $region18: #{group_linear.1} parent=11 // pred_check_branch
          %126 = sbr.rel (%p124) target = $region20
        $region19: #{group_linear.1} parent=11 // pred_region
          _
        $region20: #{group_linear.1} parent=11 // pred_fallthru
          _
      $region12: #{group_linear.1} parent=5 // pred_fallthru
        _
      %p127 = scmp.lt.s32.totalorder %s12, 2
      // Predicated region
      $region21: #{group_linear.1} parent=5 // pred_check
        %p128 = pneg %p127
      $region22: #{group_linear.1} parent=5 // pred_check_branch
        %130 = sbr.rel (%p128) target = $region24
      $region23: #{group_linear.1} parent=5 // pred_region
        // Predicated region
        $region25: #{group_linear.1} parent=23 // pred_check
          %p131 = pneg %p32
        $region26: #{group_linear.1} parent=23 // pred_check_branch
          %133 = sbr.rel (%p131) target = $region28
        $region27: #{group_linear.1} parent=23 // pred_region
          %p134 = scmp.lt.s32.totalorder %s12, 1
          %s135 = scalar_select %p134, %s12, 1
          %s136 = smul.addr %s135, 8
          %s137 = scalar_lea.vmem %s0, %s136
        $region28: #{group_linear.1} parent=23 // pred_fallthru
          _
      $region24: #{group_linear.1} parent=5 // pred_fallthru
        _
      %p138 = scmp.le.s32.totalorder 1, %s12
      %p139 = scmp.lt.s32.totalorder %s12, 3
      %p140 = pnand %p138, %p139
      %p141 = pneg %p140
      // Predicated region
      $region29: #{group_linear.1} parent=5 // pred_check
        _
      $region30: #{group_linear.1} parent=5 // pred_check_branch
        %143 = sbr.rel (%p140) target = $region32
      $region31: #{group_linear.1} parent=5 // pred_region
        %s144 = ssub.s32 %s12, 1
        %p145 = scmp.lt.s32.totalorder %s17, 1
        %s146 = scalar_select %p145, %s17, 1
        %s147 = smul.addr %s146, 8
        %s148 = scalar_lea.vmem %s0, %s147
        %p149 = pneg %p38
        %p150 = pneg %p35
        %p151 = pneg %p59
        %p152 = pneg %p56
        %p153 = pneg %p80
        %p154 = pneg %p77
        %p155 = pneg %p106
        %p156 = pneg %p103
        %s157 = sand.u32 %s93, 1
        %s158 = scalar_lea.sflag [#allocation4], %s157
        %s159 = sand.u32 %s93, 1
        %s160 = smul.addr %s159, 8
        %s161 = scalar_lea.vmem [#allocation3], %s160
        %p162 = scmp.lt.s32.totalorder %s17, 1
        %s163 = scalar_select %p162, %s17, 1
        %s164 = smul.addr %s163, 8
        %s165 = scalar_lea.vmem %s0, %s164
        %v166 = vld [vmem:[%s165] sm:$0xff]
        %v167 = vld [vmem:[%s1] sm:$0xff]
        %v168 = vld [vmem:[%s1 + $0x8] sm:$0xff]
        %v169 = vld [vmem:[%s1 + $0x10] sm:$0xff]
        %v170 = vld [vmem:[%s1 + $0x18] sm:$0xff]
        %vm171 = vcmask 261120
        %v173 = vsel %vm171, %v166, 0
        %175 = vmatprep.subr.mxu0 0.0
        %176 = vmatpush1.msra.mxu0 %v167
        %177 = vmatprep.subr.mxu0 0.0
        %178 = vmatpush1.msra.mxu0 %v168
        %179 = vmatprep.subr.mxu0 0.0
        %180 = vmatpush1.msra.mxu0 %v169
        %181 = vmatprep.subr.mxu0 0.0
        %182 = vmatpush1.msra.mxu0 %v170
        %183 = vmatprep.subr.mxu0 0.0
        %184 = vmatpush1.msra.mxu0 0.0
        %185 = vmatprep.subr.mxu0 0.0
        %186 = vmatpush1.msra.mxu0 0.0
        %187 = vmatprep.subr.mxu0 0.0
        %188 = vmatpush1.msra.mxu0 0.0
        %189 = vmatprep.subr.mxu0 0.0
        %190 = vmatpush1.msra.mxu0 0.0
        %191 = vmatprep.subr.mxu0 0.0
        %192 = vmatpush1.msra.mxu0 0.0
        %193 = vmatprep.subr.mxu0 0.0
        %194 = vmatpush1.msra.mxu0 0.0
        %195 = vmatprep.subr.mxu0 0.0
        %196 = vmatpush1.msra.mxu0 0.0
        %197 = vmatprep.subr.mxu0 0.0
        %198 = vmatpush1.msra.mxu0 0.0
        %199 = vmatprep.subr.mxu0 0.0
        %200 = vmatpush1.msra.mxu0 0.0
        %201 = vmatprep.subr.mxu0 0.0
        %202 = vmatpush1.msra.mxu0 0.0
        %203 = vmatprep.subr.mxu0 0.0
        %204 = vmatpush1.msra.mxu0 0.0
        %205 = vmatprep.subr.mxu0 0.0
        %206 = vmatpush1.msra.mxu0 0.0
        %207 = vmatprep.subr.mxu0 0.0
        %208 = vmatpush1.msra.mxu0 0.0
        %209 = vmatprep.subr.mxu0 0.0
        %210 = vmatpush1.msra.mxu0 0.0
        %211 = vmatprep.subr.mxu0 0.0
        %212 = vmatpush1.msra.mxu0 0.0
        %213 = vmatprep.subr.mxu0 0.0
        %214 = vmatpush1.msra.mxu0 0.0
        %215 = vmatprep.subr.mxu0 0.0
        %216 = vmatpush1.msra.mxu0 0.0
        %217 = vmatprep.subr.mxu0 0.0
        %218 = vmatpush1.msra.mxu0 0.0
        %219 = vmatprep.subr.mxu0 0.0
        %220 = vmatpush1.msra.mxu0 0.0
        %221 = vmatprep.subr.mxu0 0.0
        %222 = vmatpush1.msra.mxu0 0.0
        %223 = vmatprep.subr.mxu0 0.0
        %224 = vmatpush1.msra.mxu0 0.0
        %225 = vmatprep.subr.mxu0 0.0
        %226 = vmatpush1.msra.mxu0 0.0
        %227 = vmatprep.subr.mxu0 0.0
        %228 = vmatpush1.msra.mxu0 0.0
        %229 = vmatprep.subr.mxu0 0.0
        %230 = vmatpush1.msra.mxu0 0.0
        %231 = vmatprep.subr.mxu0 0.0
        %232 = vmatpush1.msra.mxu0 0.0
        %233 = vmatprep.subr.mxu0 0.0
        %234 = vmatpush1.msra.mxu0 0.0
        %235 = vmatprep.subr.mxu0 0.0
        %236 = vmatpush1.msra.mxu0 0.0
        %237 = vmatprep.subr.mxu0 0.0
        %238 = vmatpush1.msra.mxu0 0.0
        %239 = vmatprep.mubr.f32.mxu0 0.0
        %240 = vmatmul.mubr.f32.gmra.mrb[0].mxu0 %v173
        %v241 = vpop.f32.mrb[0].mxu0
        %v242 = vadd.f32 0.0, %v241
        %v243 = vpop.f32.mrb[0].mxu0
        %244 = vdwg.mxu0
        %vm245 = vcmask 523264
        %246 = vst.msk [vmem:[#allocation2] sm:$0xff] %vm245, %v242
        %v247 = vld [vmem:[#allocation2] sm:$0xff]
        %v248 = vld [vmem:[%s2] sm:$0x1]
        %v250 = vlaneseq
        %v251 = vshrl.u32 %v250, 7
        %v252 = vsub.s32 0, %v251
        %v253 = vrot.slane %v248, %v252
        %v255 = vadd.f32 %v247, %v253
        %256 = vst.msk [vmem:[%s161] sm:$0xff] %vm245, %v255
        %s257 = sand.u32 %s93, 1
        %s258 = scalar_lea.sflag [#allocation4], %s257
        %s259 = sand.u32 %s93, 1
        %s260 = smul.addr %s259, 8
        %s261 = scalar_lea.vmem [#allocation3], %s260
        // Predicated region
        $region33: #{group_linear.1} parent=31 // pred_check
          %p262 = pneg %p103
        $region34: #{group_linear.1} parent=31 // pred_check_branch
          %264 = sbr.rel (%p262) target = $region36
        $region35: #{group_linear.1} parent=31 // pred_region
          %s266 = ssub.s32 128, 128
          %267 = vsyncadd %s258, %s266
          %s268 = smul.addr %s17, 128
          %s269 = scalar_lea.hbm %s3, %s268
          %s271 = sshll.u32 %s261, 4
          %s272 = int_to_ptr.vmem [resolvable:$true] %s271
          %274 = dma.vmem_to_hbm [thread:$0]  %s272, 128, %s269, %s258
        $region36: #{group_linear.1} parent=31 // pred_fallthru
          _
      $region32: #{group_linear.1} parent=5 // pred_fallthru
        _
      %p275 = scmp.le.s32.totalorder 2, %s12
      // Predicated region
      $region37: #{group_linear.1} parent=5 // pred_check
        %p276 = pneg %p275
      $region38: #{group_linear.1} parent=5 // pred_check_branch
        %278 = sbr.rel (%p276) target = $region40
      $region39: #{group_linear.1} parent=5 // pred_region
        %s279 = ssub.s32 %s12, 2
        // Predicated region
        $region41: #{group_linear.1} parent=39 // pred_check
          %p280 = pneg %p109
        $region42: #{group_linear.1} parent=39 // pred_check_branch
          %282 = sbr.rel (%p280) target = $region44
        $region43: #{group_linear.1} parent=39 // pred_region
          %s283 = sand.u32 %s94, 1
          %s284 = scalar_lea.sflag [#allocation4], %s283
          %s285 = sand.u32 %s94, 1
          %s286 = smul.addr %s285, 8
          %s287 = scalar_lea.vmem [#allocation3], %s286
          %288 = dma.done %s284, 128
        $region44: #{group_linear.1} parent=39 // pred_fallthru
          _
      $region40: #{group_linear.1} parent=5 // pred_fallthru
        _
    $region6: #{group_linear.1} parent=1 // loop_footer
      %s16 = sadd.s32 1, %s12
    $region7: #{group_linear.1} parent=1 // loop_footer_branch
      %11 = sbr.rel target = $region3
    $region8: #{group_linear.1} parent=1 // loop_exit
      _
    %289 = vsyncpa [#allocation4], 1
    %s290 = scalar_lea.sflag [#allocation4], 1
    %291 = vsyncpa %s290, 1

</llo_original>
